<compile_context>
chip_gen: v5e
topology: v5e:2x2
jax: 0.10.0
libtpu: 0.0.40
codegen_flags: <defaults>
</compile_context>

<pallas_src>
import functools

import jax
import jax.numpy as jnp
from jax.experimental import pallas as pl
from jax.experimental.pallas import tpu as pltpu


def _round_up(n, m):
    return ((n + m - 1) // m) * m


def _fold_factor(rows, d):
    """Rows folded into the lane axis so the streamed slab is >=128 lanes wide."""
    if d < 128 and 128 % d == 0:
        f = 128 // d
        if rows % f == 0:
            return f
    return 1


def prepare_attention_params(w1, b1, w2, fold=1):
    """Pre-transform torch-layout weights once at init (hoisted off the hot path).

    fold == 1 : returns (W1ᵀ (D,H), b1 (1,H), w2 (1,H)).
    fold  > 1 : returns block-diagonal expansions for the folded (rows/f, f*D) view:
        w1_big = kron(I_f, W1ᵀ)                      (f*D, f*H)
        b1_big = tile(b1, f)                         (1,   f*H)
        w2m    = kron(I_f, w2ᵀ·1ᵀ_D)                 (f*H, f*D)
      so  s = h @ w2m  puts every row's Linear(H->1) score, already broadcast
      across that row's D lanes -> the softmax over the size-1 axis and the
      final x*alpha stay purely elementwise inside the kernel.
    """
    H, D = w1.shape
    w1_t = w1.T                                       # (D, H)
    if fold == 1:
        return w1_t, b1.reshape(1, H), w2.reshape(1, H)
    eye = jnp.eye(fold, dtype=w1.dtype)
    w1_big = jnp.kron(eye, w1_t)                      # (f*D, f*H) block diagonal
    b1_big = jnp.tile(b1, fold).reshape(1, fold * H)  # (1, f*H)
    w2_bcast = jnp.broadcast_to(w2.reshape(H, 1), (H, D))
    w2m = jnp.kron(eye, w2_bcast)                     # (f*H, f*D) block diagonal
    return w1_big, b1_big, w2m


def attention_kernel(x_ref, w1_ref, b1_ref, w2_ref, o_ref, *, folded):
    x = x_ref[...]                                                    # (TM, C)
    # fc: Linear(D -> H) + Tanh  (block-diagonal weights when rows are folded).
    h = jnp.tanh(
        jnp.dot(x, w1_ref[...], preferred_element_type=jnp.float32) + b1_ref[...]
    )                                                                 # (TM, f*H)
    if folded:
        # Per-row score already broadcast across that row's D lanes by w2m.
        # Extra MXU pass is free filler under the HBM bound for the small H this
        # module uses.  TODO(synk): for very large H, chunk the fc over H (or elide
        # the dead compute entirely, since alpha == 1) to stay under the MXU ridge.
        s = jnp.dot(h, w2_ref[...], preferred_element_type=jnp.float32)  # (TM, C)
        # softmax over torch dim=2 (size-1 axis): max == s, the sum has one term.
        e = jnp.exp(s - s)
        alpha = e / e                                                    # == 1.0
    else:
        # linear: Linear(H -> 1, bias=False) as VPU multiply + XLU reduce
        # (an N=1 MXU matmul would waste a whole pass).
        s = jnp.sum(h * w2_ref[...], axis=-1, keepdims=True)            # (TM, 1)
        m = jnp.max(s, axis=-1, keepdims=True)
        e = jnp.exp(s - m)
        alpha = e / jnp.sum(e, axis=-1, keepdims=True)                   # == 1.0
    o_ref[...] = (x * alpha).astype(o_ref.dtype)


# ~2 MiB of x per grid step: measured mem-bound kernels only reach ~85%+ of the
# HBM roofline at multi-hundred-KiB -> MiB tiles; double-buffered in+out is then
# ~8 MiB, leaving plenty of headroom on every generation (v7x: 64 MiB physical).
_TARGET_TILE_BYTES = 2 * 1024 * 1024


def _choose_tile_rows(R, C, itemsize):
    """Size the row tile by bytes, not rows."""
    tm = _TARGET_TILE_BYTES // max(1, C * itemsize)
    tm = max(256, min(8192, _round_up(tm, 256)))
    if tm >= R:
        if R >= 1024:
            # v7x megacore: the single "parallel" grid axis only uses both
            # TensorCores when grid >= 2.  No-op on single-TC v5e/v6e.
            tm = _round_up(pl.cdiv(R, 2), 8)
        else:
            tm = R
    return tm


def attention_forward(x, w1, b1, w2):
    """x: (B, T, D); w1: (H, D) torch layout; b1: (H,); w2: (1, H) torch layout."""
    B, T, D = x.shape
    H = w1.shape[0]
    rows = B * T

    fold = _fold_factor(rows, D)
    # NOTE: in production, `fold` is static per model/shape — call
    # prepare_attention_params once at init and reuse the result.
    w1_p, b1_p, w2_p = prepare_attention_params(w1, b1, w2, fold)

    C = fold * D                 # lane width of the streamed slab (>=128 when folded)
    R = rows // fold             # rows of the folded slab
    x2d = x.reshape(R, C)        # contiguous view: no pad, no extra HBM pass

    tm = _choose_tile_rows(R, C, x.dtype.itemsize)
    # Ragged last block: Pallas masks the out-of-bounds stores; the garbage rows it
    # computes on are row-local (tanh/exp) and never written, so outputs are exact.
    grid = pl.cdiv(R, tm)

    out2d = pl.pallas_call(
        functools.partial(attention_kernel, folded=(fold > 1)),
        out_shape=jax.ShapeDtypeStruct((R, C), x.dtype),
        grid_spec=pl.GridSpec(
            grid=(grid,),
            in_specs=[
                # x tile: streamed + double-buffered by the auto-pipeline.
                pl.BlockSpec((tm, C), lambda i: (i, 0)),
                # Grid-invariant operands: whole-array VMEM residency (one copy,
                # no dead second pipeline buffer, no per-step DMA).
                pl.BlockSpec(memory_space=pltpu.MemorySpace.VMEM),
                pl.BlockSpec(memory_space=pltpu.MemorySpace.VMEM),
                pl.BlockSpec(memory_space=pltpu.MemorySpace.VMEM),
            ],
            # Lane-dense output (C >= 128 when D < 128): full-width vst, no vst.msk.
            out_specs=pl.BlockSpec((tm, C), lambda i: (i, 0)),
        ),
        compiler_params=pltpu.CompilerParams(
            dimension_semantics=("parallel",),   # megacore split on v7x
            vmem_limit_bytes=48 * 1024 * 1024,   # > v5e's 16 MiB default, < v7x's 64 MiB physical
        ),
    )(x2d, w1_p, b1_p, w2_p)

    return out2d.reshape(B, T, D)


def attention_reference(x, w1, b1, w2):
    h = jnp.tanh(jnp.einsum("btd,hd->bth", x, w1) + b1)
    s = jnp.einsum("bth,oh->bto", h, w2)          # (B, T, 1)
    alpha = jax.nn.softmax(s, axis=2)
    return x * alpha


if __name__ == "__main__":
    B, T = 2, 8
    input_size, hidden_size = 32, 32

    key = jax.random.PRNGKey(0)
    kx, kw1, kb1, kw2 = jax.random.split(key, 4)

    x = jax.random.normal(kx, (B, T, input_size), dtype=jnp.float32)

    # Deterministic PyTorch-style init: U(-1/sqrt(fan_in), 1/sqrt(fan_in)).
    bound1 = 1.0 / (input_size ** 0.5)
    w1 = jax.random.uniform(kw1, (hidden_size, input_size), jnp.float32, -bound1, bound1)
    b1 = jax.random.uniform(kb1, (hidden_size,), jnp.float32, -bound1, bound1)
    bound2 = 1.0 / (hidden_size ** 0.5)
    w2 = jax.random.uniform(kw2, (1, hidden_size), jnp.float32, -bound2, bound2)

    # Folded (lane-dense) path: rows=16, D=32 -> fold=4, slab (4, 128).
    out = jax.block_until_ready(attention_forward(x, w1, b1, w2))
    ref = attention_reference(x, w1, b1, w2)
    assert jnp.allclose(out, ref, atol=1e-5, rtol=1e-5)

    # Unfolded fallback path: rows=14 is not a multiple of 128 // D = 4.
    x2 = jax.random.normal(kx, (2, 7, input_size), dtype=jnp.float32)
    out2 = jax.block_until_ready(attention_forward(x2, w1, b1, w2))
    ref2 = attention_reference(x2, w1, b1, w2)
    assert jnp.allclose(out2, ref2, atol=1e-5, rtol=1e-5)

    print("KERNEL_OK")
</pallas_src>

<mosaic_0001>
module attributes {stable_mosaic.version = 11 : i64} {
  func.func @attention_kernel(%arg0: i32, %arg1: memref<4x128xf32, #tpu.memory_space<vmem>>, %arg2: memref<128x128xf32, #tpu.memory_space<vmem>>, %arg3: memref<1x128xf32, #tpu.memory_space<vmem>>, %arg4: memref<128x128xf32, #tpu.memory_space<vmem>>, %arg5: memref<4x128xf32, #tpu.memory_space<vmem>>) attributes {dimension_semantics = [#tpu.dimension_semantics<parallel>], iteration_bounds = array<i64: 1>, scalar_prefetch = 0 : i64, scratch_operands = 0 : i64, tpu.core_type = #tpu.core_type<tc>, window_params = [{transform_indices = @transform_0, window_bounds = array<i64: 4, 128>}, {pipeline_mode = #tpu.pipeline_mode<synchronous>, transform_indices = @transform_1, window_bounds = array<i64: 128, 128>}, {pipeline_mode = #tpu.pipeline_mode<synchronous>, transform_indices = @transform_2, window_bounds = array<i64: 1, 128>}, {pipeline_mode = #tpu.pipeline_mode<synchronous>, transform_indices = @transform_3, window_bounds = array<i64: 128, 128>}, {transform_indices = @transform_4, window_bounds = array<i64: 4, 128>}]} {
    %c0 = arith.constant 0 : index
    %c0_0 = arith.constant 0 : index
    %0 = vector.load %arg1[%c0, %c0_0] : memref<4x128xf32, #tpu.memory_space<vmem>>, vector<4x128xf32>
    %c0_1 = arith.constant 0 : index
    %c0_2 = arith.constant 0 : index
    %1 = vector.load %arg2[%c0_1, %c0_2] : memref<128x128xf32, #tpu.memory_space<vmem>>, vector<128x128xf32>
    %cst = arith.constant dense<0.000000e+00> : vector<4x128xf32>
    %2 = tpu.matmul %0, %1, %cst {dimension_numbers = #tpu.dot_dimension_numbers<[1], [0], [0], [1], [0, 0, 1, 1], [], []>} : vector<4x128xf32>, vector<128x128xf32>, vector<4x128xf32> -> vector<4x128xf32>
    %c0_3 = arith.constant 0 : index
    %c0_4 = arith.constant 0 : index
    %3 = vector.load %arg3[%c0_3, %c0_4] : memref<1x128xf32, #tpu.memory_space<vmem>>, vector<1x128xf32>
    %4 = vector.broadcast %3 : vector<1x128xf32> to vector<4x128xf32>
    %5 = arith.addf %2, %4 : vector<4x128xf32>
    %6 = math.tanh %5 : vector<4x128xf32>
    %c0_5 = arith.constant 0 : index
    %c0_6 = arith.constant 0 : index
    %7 = vector.load %arg4[%c0_5, %c0_6] : memref<128x128xf32, #tpu.memory_space<vmem>>, vector<128x128xf32>
    %cst_7 = arith.constant dense<0.000000e+00> : vector<4x128xf32>
    %8 = tpu.matmul %6, %7, %cst_7 {dimension_numbers = #tpu.dot_dimension_numbers<[1], [0], [0], [1], [0, 0, 1, 1], [], []>} : vector<4x128xf32>, vector<128x128xf32>, vector<4x128xf32> -> vector<4x128xf32>
    %9 = arith.subf %8, %8 : vector<4x128xf32>
    %10 = math.exp %9 : vector<4x128xf32>
    %11 = arith.divf %10, %10 : vector<4x128xf32>
    %12 = arith.mulf %0, %11 : vector<4x128xf32>
    %c0_8 = arith.constant 0 : index
    %c0_9 = arith.constant 0 : index
    %13 = vector.load %arg5[%c0_8, %c0_9] : memref<4x128xf32, #tpu.memory_space<vmem>>, vector<4x128xf32>
    tpu.vector_store %arg5[%c0_8, %c0_9], %12 {strides = array<i32>} : memref<4x128xf32, #tpu.memory_space<vmem>>, vector<4x128xf32>,
    return
  }
  func.func @transform_0(%arg0: i32) -> (i32, i32) {
    %c0_i32 = arith.constant 0 : i32
    %c0_i32_0 = arith.constant 0 : i32
    return %arg0, %c0_i32 : i32, i32
  }
  func.func @transform_1(%arg0: i32) -> (i32, i32) {
    %c0_i32 = arith.constant 0 : i32
    %c0_i32_0 = arith.constant 0 : i32
    %c0_i32_1 = arith.constant 0 : i32
    return %c0_i32, %c0_i32_0 : i32, i32
  }
  func.func @transform_2(%arg0: i32) -> (i32, i32) {
    %c0_i32 = arith.constant 0 : i32
    %c0_i32_0 = arith.constant 0 : i32
    %c0_i32_1 = arith.constant 0 : i32
    return %c0_i32, %c0_i32_0 : i32, i32
  }
  func.func @transform_3(%arg0: i32) -> (i32, i32) {
    %c0_i32 = arith.constant 0 : i32
    %c0_i32_0 = arith.constant 0 : i32
    %c0_i32_1 = arith.constant 0 : i32
    return %c0_i32, %c0_i32_0 : i32, i32
  }
  func.func @transform_4(%arg0: i32) -> (i32, i32) {
    %c0_i32 = arith.constant 0 : i32
    %c0_i32_0 = arith.constant 0 : i32
    return %arg0, %c0_i32 : i32, i32
  }
}

</mosaic_0001>

<llo_original>
// kernel: tpu_custom_call.1
$region0: #{tpu_custom_call.1}
  #allocation0 [shape = 'u32[]', space=smem, size = 0x4, offset = 0x4, fixed_abs, tag = 'smem constant byte address 0x4 - core index']
  #allocation1 [shape = 'u32[72,128]{1,0:T(1,128)}', space=vmem, size = 0x9000, scoped, tag = 'internal scratch']
  %s0 = inlined_call_operand.hbm [shape: f32[4,128], index: 0, kind: input, shape index: {}]
  %s1 = inlined_call_operand.hbm [shape: f32[128,128], index: 1, kind: input, shape index: {}]
  %s2 = inlined_call_operand.vmem [shape: f32[1,128], index: 2, kind: input, shape index: {}]
  %s3 = inlined_call_operand.hbm [shape: f32[128,128], index: 3, kind: input, shape index: {}]
  %s4 = inlined_call_operand.hbm [shape: f32[4,128], index: 4, kind: output, shape index: {}]
  %s5 = sld [smem:[#allocation0]]
  $region38: #{tpu_custom_call.1} parent=0
    _
  %s7 = ssub.s32 1, %s5
  %s8 = scalar_select 0, %s7, %s5
  $region1: #{tpu_custom_call.1} parent=0
    #allocation2 [shape = 'u8[2048]{0}', space=vmem, size = 0x800, scoped, tag = 'input window, operand 0, single buffered']
    #allocation3 [shape = 's32[1]{0}', space=sflag, size = 0x4, scoped, tag = 'scoped memory for tpu_custom_call.1']
    #allocation4 [shape = 's32[1]{0}', space=sflag, size = 0x4, scoped, tag = 'scoped memory for tpu_custom_call.1']
    #allocation5 [shape = 'u8[65536]{0}', space=vmem, size = 0x10000, scoped, tag = 'input window, operand 1, single buffered']
    #allocation6 [shape = 's32[1]{0}', space=sflag, size = 0x4, scoped, tag = 'scoped memory for tpu_custom_call.1']
    #allocation7 [shape = 'u8[65536]{0}', space=vmem, size = 0x10000, scoped, tag = 'input window, operand 3, single buffered']
    #allocation8 [shape = 'u8[2048]{0}', space=vmem, size = 0x800, scoped, tag = 'output window, operand 0, single buffered']
    %9 = vsyncpa [#allocation3], 0
    %10 = vsyncpa [#allocation6], 0
    %11 = vsyncpa [#allocation4], 0
    // Predicated region
    $region2: #{tpu_custom_call.1} parent=1 // pred_check
      _
    $region3: #{tpu_custom_call.1} parent=1 // pred_check_branch
      %13 = sbr.rel (0) target = $region5
    $region4: #{tpu_custom_call.1} parent=1 // pred_region
      %15 = vsyncadd [#allocation3], 0
      %s17 = sshll.u32 %s0, 4
      %s18 = int_to_ptr.hbm [resolvable:$true] %s17
      %s19 = sshll.u32 [#allocation2], 4
      %s20 = int_to_ptr.vmem [resolvable:$true] %s19
      %22 = dma.hbm_to_vmem [thread:$0]  %s18, 64, %s20, [#allocation3]
    $region5: #{tpu_custom_call.1} parent=1 // pred_fallthru
      _
    // Predicated region
    $region6: #{tpu_custom_call.1} parent=1 // pred_check
      _
    $region7: #{tpu_custom_call.1} parent=1 // pred_check_branch
      %24 = sbr.rel (0) target = $region9
    $region8: #{tpu_custom_call.1} parent=1 // pred_region
      %26 = vsyncadd [#allocation6], 0
      %s27 = sshll.u32 %s1, 4
      %s28 = int_to_ptr.hbm [resolvable:$true] %s27
      %s29 = sshll.u32 [#allocation5], 4
      %s30 = int_to_ptr.vmem [resolvable:$true] %s29
      %35 = dma.hbm_to_vmem [thread:$0]  %s28, 2048, %s30, [#allocation6], 128, 128, 8
    $region9: #{tpu_custom_call.1} parent=1 // pred_fallthru
      _
    // Predicated region
    $region10: #{tpu_custom_call.1} parent=1 // pred_check
      _
    $region11: #{tpu_custom_call.1} parent=1 // pred_check_branch
      %37 = sbr.rel (0) target = $region13
    $region12: #{tpu_custom_call.1} parent=1 // pred_region
      _
    $region13: #{tpu_custom_call.1} parent=1 // pred_fallthru
      _
    // Predicated region
    $region14: #{tpu_custom_call.1} parent=1 // pred_check
      _
    $region15: #{tpu_custom_call.1} parent=1 // pred_check_branch
      %39 = sbr.rel (0) target = $region17
    $region16: #{tpu_custom_call.1} parent=1 // pred_region
      %41 = vsyncadd [#allocation6], 0
      %s42 = sshll.u32 %s3, 4
      %s43 = int_to_ptr.hbm [resolvable:$true] %s42
      %s44 = sshll.u32 [#allocation7], 4
      %s45 = int_to_ptr.vmem [resolvable:$true] %s44
      %50 = dma.hbm_to_vmem [thread:$0]  %s43, 2048, %s45, [#allocation6], 128, 128, 8
    $region17: #{tpu_custom_call.1} parent=1 // pred_fallthru
      _
    // Predicated region
    $region18: #{tpu_custom_call.1} parent=1 // pred_check
      _
    $region19: #{tpu_custom_call.1} parent=1 // pred_check_branch
      %52 = sbr.rel (0) target = $region21
    $region20: #{tpu_custom_call.1} parent=1 // pred_region
      %54 = dma.done [#allocation3], 64
    $region21: #{tpu_custom_call.1} parent=1 // pred_fallthru
      _
    // Predicated region
    $region22: #{tpu_custom_call.1} parent=1 // pred_check
      _
    $region23: #{tpu_custom_call.1} parent=1 // pred_check_branch
      %56 = sbr.rel (0) target = $region25
    $region24: #{tpu_custom_call.1} parent=1 // pred_region
      %58 = dma.done [#allocation6], 2048
    $region25: #{tpu_custom_call.1} parent=1 // pred_fallthru
      _
    // Predicated region
    $region26: #{tpu_custom_call.1} parent=1 // pred_check
      _
    $region27: #{tpu_custom_call.1} parent=1 // pred_check_branch
      %60 = sbr.rel (0) target = $region29
    $region28: #{tpu_custom_call.1} parent=1 // pred_region
      %62 = dma.done [#allocation6], 2048
    $region29: #{tpu_custom_call.1} parent=1 // pred_fallthru
      _
    %v63 = vld [vmem:[#allocation2] sm:$0xf]
    %v64 = vld [vmem:[#allocation5] sm:$0xff]
    %v65 = vld [vmem:[#allocation5 + $0x8] sm:$0xff]
    %v66 = vld [vmem:[#allocation5 + $0x10] sm:$0xff]
    %v67 = vld [vmem:[#allocation5 + $0x18] sm:$0xff]
    %v68 = vld [vmem:[#allocation5 + $0x20] sm:$0xff]
    %v69 = vld [vmem:[#allocation5 + $0x28] sm:$0xff]
    %v70 = vld [vmem:[#allocation5 + $0x30] sm:$0xff]
    %v71 = vld [vmem:[#allocation5 + $0x38] sm:$0xff]
    %v72 = vld [vmem:[#allocation5 + $0x40] sm:$0xff]
    %v73 = vld [vmem:[#allocation5 + $0x48] sm:$0xff]
    %v74 = vld [vmem:[#allocation5 + $0x50] sm:$0xff]
    %v75 = vld [vmem:[#allocation5 + $0x58] sm:$0xff]
    %v76 = vld [vmem:[#allocation5 + $0x60] sm:$0xff]
    %v77 = vld [vmem:[#allocation5 + $0x68] sm:$0xff]
    %v78 = vld [vmem:[#allocation5 + $0x70] sm:$0xff]
    %v79 = vld [vmem:[#allocation5 + $0x78] sm:$0xff]
    %v80 = vld [vmem:[%s2] sm:$0x1]
    %v82 = vperm.slane %v80, 0
    %84 = vmatpush.msra.mxu0 %v79
    %85 = vmatpush.msra.mxu0 %v78
    %86 = vmatpush.msra.mxu0 %v77
    %87 = vmatpush.msra.mxu0 %v76
    %88 = vmatpush.msra.mxu0 %v75
    %89 = vmatpush.msra.mxu0 %v74
    %90 = vmatpush.msra.mxu0 %v73
    %91 = vmatpush.msra.mxu0 %v72
    %92 = vmatpush.msra.mxu0 %v71
    %93 = vmatpush.msra.mxu0 %v70
    %94 = vmatpush.msra.mxu0 %v69
    %95 = vmatpush.msra.mxu0 %v68
    %96 = vmatpush.msra.mxu0 %v67
    %97 = vmatpush.msra.mxu0 %v66
    %98 = vmatpush.msra.mxu0 %v65
    %99 = vmatpush.msra.mxu0 %v64
    %100 = vmatmul.f32.gmra.mxu0 %v63
    %v101 = vpop.f32.mrf.mxu0
    %v102 = vadd.f32 %v82, %v101
    %103 = vdwg.mxu0
    %v104 = vtanh.pop %v102
    %v105 = vld [vmem:[#allocation7] sm:$0xff]
    %v106 = vld [vmem:[#allocation7 + $0x8] sm:$0xff]
    %v107 = vld [vmem:[#allocation7 + $0x10] sm:$0xff]
    %v108 = vld [vmem:[#allocation7 + $0x18] sm:$0xff]
    %v109 = vld [vmem:[#allocation7 + $0x20] sm:$0xff]
    %v110 = vld [vmem:[#allocation7 + $0x28] sm:$0xff]
    %v111 = vld [vmem:[#allocation7 + $0x30] sm:$0xff]
    %v112 = vld [vmem:[#allocation7 + $0x38] sm:$0xff]
    %v113 = vld [vmem:[#allocation7 + $0x40] sm:$0xff]
    %v114 = vld [vmem:[#allocation7 + $0x48] sm:$0xff]
    %v115 = vld [vmem:[#allocation7 + $0x50] sm:$0xff]
    %v116 = vld [vmem:[#allocation7 + $0x58] sm:$0xff]
    %v117 = vld [vmem:[#allocation7 + $0x60] sm:$0xff]
    %v118 = vld [vmem:[#allocation7 + $0x68] sm:$0xff]
    %v119 = vld [vmem:[#allocation7 + $0x70] sm:$0xff]
    %v120 = vld [vmem:[#allocation7 + $0x78] sm:$0xff]
    %121 = vmatpush.msra.mxu0 %v120
    %122 = vmatpush.msra.mxu0 %v119
    %123 = vmatpush.msra.mxu0 %v118
    %124 = vmatpush.msra.mxu0 %v117
    %125 = vmatpush.msra.mxu0 %v116
    %126 = vmatpush.msra.mxu0 %v115
    %127 = vmatpush.msra.mxu0 %v114
    %128 = vmatpush.msra.mxu0 %v113
    %129 = vmatpush.msra.mxu0 %v112
    %130 = vmatpush.msra.mxu0 %v111
    %131 = vmatpush.msra.mxu0 %v110
    %132 = vmatpush.msra.mxu0 %v109
    %133 = vmatpush.msra.mxu0 %v108
    %134 = vmatpush.msra.mxu0 %v107
    %135 = vmatpush.msra.mxu0 %v106
    %136 = vmatpush.msra.mxu0 %v105
    %137 = vmatmul.f32.gmra.mxu0 %v104
    %v138 = vpop.f32.mrf.mxu0
    %v139 = vadd.f32 0.0, %v138
    %140 = vdwg.mxu0
    %v141 = vsub.f32 %v139, %v139
    %v142 = vmul.f32 %v141, 1.442695
    %v143 = vpow.pop %v142
    %v144 = vrcp.pop %v143
    %v145 = vmul.f32 %v143, %v144
    %v146 = vsub.f32 1.0, %v145
    %v147 = vmul.f32 %v144, %v146
    %v148 = vadd.f32 %v144, %v147
    %vm149 = vweird.f32 %v143
    %vm150 = vweird.f32 %v144
    %vm151 = vmor %vm149, %vm150
    %v152 = vsel %vm151, %v144, %v148
    %v153 = vand.u32 2147483647, %v143
    %vm154 = vcmp.eq.f32.partialorder %v153, 8.507059e+37
    %v155 = vand.u32 %v143, 2147483648
    %v156 = vor.u32 1.1754944e-38, %v155
    %v157 = vsel %vm154, %v156, %v152
    %v158 = vmul.f32 %v143, %v157
    %v159 = vmul.f32 %v63, %v158
    %160 = vst [vmem:[#allocation8] sm:$0xf] %v159
    // Predicated region
    $region30: #{tpu_custom_call.1} parent=1 // pred_check
      _
    $region31: #{tpu_custom_call.1} parent=1 // pred_check_branch
      %162 = sbr.rel (0) target = $region33
    $region32: #{tpu_custom_call.1} parent=1 // pred_region
      %164 = vsyncadd [#allocation4], 0
      %s166 = sshll.u32 [#allocation8], 4
      %s167 = int_to_ptr.vmem [resolvable:$true] %s166
      %s168 = sshll.u32 %s4, 4
      %s169 = int_to_ptr.hbm [resolvable:$true] %s168
      %171 = dma.vmem_to_hbm [thread:$0]  %s167, 64, %s169, [#allocation4]
    $region33: #{tpu_custom_call.1} parent=1 // pred_fallthru
      _
    // Predicated region
    $region34: #{tpu_custom_call.1} parent=1 // pred_check
      _
    $region35: #{tpu_custom_call.1} parent=1 // pred_check_branch
      %173 = sbr.rel (0) target = $region37
    $region36: #{tpu_custom_call.1} parent=1 // pred_region
      %175 = dma.done [#allocation4], 64
    $region37: #{tpu_custom_call.1} parent=1 // pred_fallthru
      _
    %176 = vsyncpa [#allocation3], 1
    %177 = vsyncpa [#allocation6], 1
    %178 = vsyncpa [#allocation4], 1

</llo_original>
